<compile_context>
chip_gen: v5e
topology: v5e:2x2
jax: 0.10.0
libtpu: 0.0.40
codegen_flags: <defaults>
</compile_context>

<pallas_src>
import jax
import jax.numpy as jnp
from jax.experimental import pallas as pl
from jax.experimental.pallas import tpu as pltpu  # noqa: F401  (TPU backend assumed)

# ---- small, module-consistent hyper-params -------------------------------
IMG_SIZE = 16
PATCH_SIZE = 2
IN_CHANNELS = 3
EMBEDDING_DIM = 32
HIDDEN_DIM = 64
OUTPUT_DIM = 32
NUM_REF = 3
BATCH = 2

PATCH_DIM = IN_CHANNELS * PATCH_SIZE * PATCH_SIZE  # flattened patch size


def _guidance_kernel(pooled_ref, w_emb_ref, b_emb_ref,
                     w1_ref, b1_ref, w2_ref, b2_ref, out_ref):
    """Single invocation processes ALL B*N frames at once.

    pooled_ref : (BN, Kp)   per-frame mean (over patch positions) of the flattened patch
    w_emb_ref  : (Kp, E)    conv (patch-embed) weight reshaped to [C*p*p, E]
    b_emb_ref  : (1, E)
    w1_ref     : (E, HID)   first MLP linear
    b1_ref     : (1, HID)
    w2_ref     : (HID, OUT) second MLP linear
    b2_ref     : (1, OUT)
    out_ref    : (BN, OUT)
    """
    pooled = pooled_ref[...]                                            # (BN, Kp)

    # patch-embed + (already applied) average pool: mean(patches) @ W + b
    emb = jnp.dot(pooled, w_emb_ref[...],
                  preferred_element_type=jnp.float32) + b_emb_ref[...]  # (BN, E)

    # MLP: Linear -> ReLU -> (Dropout: identity at inference) -> Linear
    h = jnp.dot(emb, w1_ref[...],
                preferred_element_type=jnp.float32) + b1_ref[...]       # (BN, HID)
    h = jnp.maximum(h, 0.0)
    out_ref[...] = jnp.dot(h, w2_ref[...],
                           preferred_element_type=jnp.float32) + b2_ref[...]  # (BN, OUT)


def appearance_guidance_forward(references, params):
    """references: [B, N, C, H, W] float32 -> [B, N, OUTPUT_DIM] float32."""
    b, n, c, h, w = references.shape
    assert n == NUM_REF
    p = PATCH_SIZE
    bn = b * n
    patch_dim = c * p * p

    # Pool-before-embed (exact by linearity; the pool precedes the ReLU).
    # Mean over the (h/p, w/p) patch grid -> one "average patch" (c, p, p) per
    # frame, flattened in (c, p_row, p_col) order to match the conv-weight flatten.
    x = references.reshape(bn, c, h // p, p, w // p, p)
    pooled = x.mean(axis=(2, 4)).reshape(bn, patch_dim)          # (BN, C*p*p)

    # conv weight [E, C, p, p] -> [C*p*p, E]; linears transposed to [K_in, K_out]
    w_emb = params["w_emb"].reshape(EMBEDDING_DIM, patch_dim).T
    b_emb = params["b_emb"].reshape(1, EMBEDDING_DIM)
    w1 = params["w1"].T                                          # [E, HID]
    b1 = params["b1"].reshape(1, HIDDEN_DIM)
    w2 = params["w2"].T                                          # [HID, OUT]
    b2 = params["b2"].reshape(1, OUTPUT_DIM)

    # No grid: one kernel step, every operand is a whole-array VMEM block
    # (total resident footprint < 100 KB), single output store.
    out = pl.pallas_call(
        _guidance_kernel,
        out_shape=jax.ShapeDtypeStruct((bn, OUTPUT_DIM), jnp.float32),
    )(pooled, w_emb, b_emb, w1, b1, w2, b2)

    return out.reshape(b, n, OUTPUT_DIM)


def _reference_forward(references, params):
    """Pure-JAX reference of the ORIGINAL (unfused) computation for verification."""
    b, n, c, h, w = references.shape
    p = PATCH_SIZE
    bn = b * n
    x = references.reshape(bn, c, h, w)
    x = x.reshape(bn, c, h // p, p, w // p, p)
    x = x.transpose(0, 2, 4, 1, 3, 5).reshape(bn, -1, c * p * p)   # (BN, P, C*p*p)
    w_emb = params["w_emb"].reshape(EMBEDDING_DIM, -1).T
    emb = x @ w_emb + params["b_emb"][None, None, :]               # (BN, P, E)
    pooled = emb.mean(axis=1)                                      # (BN, E)
    hdn = jnp.maximum(pooled @ params["w1"].T + params["b1"][None, :], 0.0)
    out = hdn @ params["w2"].T + params["b2"][None, :]
    return out.reshape(b, n, OUTPUT_DIM)


def _init_params(key):
    """Deterministic synthetic weights, PyTorch-like shapes."""
    ks = jax.random.split(key, 6)
    scale = 0.05
    return {
        # Conv2d(in, E, k=p, s=p): weight [E, C, p, p], bias [E]
        "w_emb": scale * jax.random.normal(
            ks[0], (EMBEDDING_DIM, IN_CHANNELS, PATCH_SIZE, PATCH_SIZE), jnp.float32),
        "b_emb": scale * jax.random.normal(ks[1], (EMBEDDING_DIM,), jnp.float32),
        # Linear(E, HID): weight [HID, E], bias [HID]
        "w1": scale * jax.random.normal(ks[2], (HIDDEN_DIM, EMBEDDING_DIM), jnp.float32),
        "b1": scale * jax.random.normal(ks[3], (HIDDEN_DIM,), jnp.float32),
        # Linear(HID, OUT): weight [OUT, HID], bias [OUT]
        "w2": scale * jax.random.normal(ks[4], (OUTPUT_DIM, HIDDEN_DIM), jnp.float32),
        "b2": scale * jax.random.normal(ks[5], (OUTPUT_DIM,), jnp.float32),
    }


if __name__ == "__main__":
    key = jax.random.PRNGKey(0)
    k_in, k_par = jax.random.split(key)
    references = jax.random.normal(
        k_in, (BATCH, NUM_REF, IN_CHANNELS, IMG_SIZE, IMG_SIZE), jnp.float32)
    params = _init_params(k_par)

    out = appearance_guidance_forward(references, params)
    out = jax.block_until_ready(out)

    ref = _reference_forward(references, params)
    assert out.shape == (BATCH, NUM_REF, OUTPUT_DIM)
    assert jnp.allclose(out, ref, atol=1e-5, rtol=1e-5), "mismatch vs reference"

    # Dropout is identity at inference time, so no randomness is needed.
    print("KERNEL_OK")
</pallas_src>

<mosaic_0001>
module attributes {stable_mosaic.version = 11 : i64} {
  func.func @_guidance_kernel(%arg0: memref<6x12xf32, #tpu.memory_space<vmem>>, %arg1: memref<12x32xf32, #tpu.memory_space<vmem>>, %arg2: memref<1x32xf32, #tpu.memory_space<vmem>>, %arg3: memref<32x64xf32, #tpu.memory_space<vmem>>, %arg4: memref<1x64xf32, #tpu.memory_space<vmem>>, %arg5: memref<64x32xf32, #tpu.memory_space<vmem>>, %arg6: memref<1x32xf32, #tpu.memory_space<vmem>>, %arg7: memref<6x32xf32, #tpu.memory_space<vmem>>) attributes {dimension_semantics = [], scalar_prefetch = 0 : i64, scratch_operands = 0 : i64, tpu.core_type = #tpu.core_type<tc>} {
    %c0 = arith.constant 0 : index
    %c0_0 = arith.constant 0 : index
    %0 = vector.load %arg0[%c0, %c0_0] : memref<6x12xf32, #tpu.memory_space<vmem>>, vector<6x12xf32>
    %c0_1 = arith.constant 0 : index
    %c0_2 = arith.constant 0 : index
    %1 = vector.load %arg1[%c0_1, %c0_2] : memref<12x32xf32, #tpu.memory_space<vmem>>, vector<12x32xf32>
    %cst = arith.constant dense<0.000000e+00> : vector<6x32xf32>
    %2 = tpu.matmul %0, %1, %cst {dimension_numbers = #tpu.dot_dimension_numbers<[1], [0], [0], [1], [0, 0, 1, 1], [], []>} : vector<6x12xf32>, vector<12x32xf32>, vector<6x32xf32> -> vector<6x32xf32>
    %c0_3 = arith.constant 0 : index
    %c0_4 = arith.constant 0 : index
    %3 = vector.load %arg2[%c0_3, %c0_4] : memref<1x32xf32, #tpu.memory_space<vmem>>, vector<1x32xf32>
    %4 = vector.broadcast %3 : vector<1x32xf32> to vector<6x32xf32>
    %5 = arith.addf %2, %4 : vector<6x32xf32>
    %c0_5 = arith.constant 0 : index
    %c0_6 = arith.constant 0 : index
    %6 = vector.load %arg3[%c0_5, %c0_6] : memref<32x64xf32, #tpu.memory_space<vmem>>, vector<32x64xf32>
    %cst_7 = arith.constant dense<0.000000e+00> : vector<6x64xf32>
    %7 = tpu.matmul %5, %6, %cst_7 {dimension_numbers = #tpu.dot_dimension_numbers<[1], [0], [0], [1], [0, 0, 1, 1], [], []>} : vector<6x32xf32>, vector<32x64xf32>, vector<6x64xf32> -> vector<6x64xf32>
    %c0_8 = arith.constant 0 : index
    %c0_9 = arith.constant 0 : index
    %8 = vector.load %arg4[%c0_8, %c0_9] : memref<1x64xf32, #tpu.memory_space<vmem>>, vector<1x64xf32>
    %9 = vector.broadcast %8 : vector<1x64xf32> to vector<6x64xf32>
    %10 = arith.addf %7, %9 : vector<6x64xf32>
    %cst_10 = arith.constant 0.000000e+00 : f32
    %11 = vector.broadcast %cst_10 : f32 to vector<6x64xf32>
    %12 = arith.maximumf %10, %11 : vector<6x64xf32>
    %c0_11 = arith.constant 0 : index
    %c0_12 = arith.constant 0 : index
    %13 = vector.load %arg5[%c0_11, %c0_12] : memref<64x32xf32, #tpu.memory_space<vmem>>, vector<64x32xf32>
    %cst_13 = arith.constant dense<0.000000e+00> : vector<6x32xf32>
    %14 = tpu.matmul %12, %13, %cst_13 {dimension_numbers = #tpu.dot_dimension_numbers<[1], [0], [0], [1], [0, 0, 1, 1], [], []>} : vector<6x64xf32>, vector<64x32xf32>, vector<6x32xf32> -> vector<6x32xf32>
    %c0_14 = arith.constant 0 : index
    %c0_15 = arith.constant 0 : index
    %15 = vector.load %arg6[%c0_14, %c0_15] : memref<1x32xf32, #tpu.memory_space<vmem>>, vector<1x32xf32>
    %16 = vector.broadcast %15 : vector<1x32xf32> to vector<6x32xf32>
    %17 = arith.addf %14, %16 : vector<6x32xf32>
    %c0_16 = arith.constant 0 : index
    %c0_17 = arith.constant 0 : index
    %18 = vector.load %arg7[%c0_16, %c0_17] : memref<6x32xf32, #tpu.memory_space<vmem>>, vector<6x32xf32>
    tpu.vector_store %arg7[%c0_16, %c0_17], %17 {strides = array<i32>} : memref<6x32xf32, #tpu.memory_space<vmem>>, vector<6x32xf32>,
    return
  }
}

</mosaic_0001>

<llo_original>
// kernel: tpu_custom_call.1
$region0: #{tpu_custom_call.1}
  #allocation0 [shape = 'u32[]', space=smem, size = 0x4, offset = 0x4, fixed_abs, tag = 'smem constant byte address 0x4 - core index']
  #allocation1 [shape = 'u32[72,128]{1,0:T(1,128)}', space=vmem, size = 0x9000, scoped, tag = 'internal scratch']
  %s0 = inlined_call_operand.vmem [shape: f32[6,12], index: 0, kind: input, shape index: {}]
  %s1 = inlined_call_operand.vmem [shape: f32[12,32], index: 1, kind: input, shape index: {}]
  %s2 = inlined_call_operand.vmem [shape: f32[1,32], index: 2, kind: input, shape index: {}]
  %s3 = inlined_call_operand.vmem [shape: f32[32,64], index: 3, kind: input, shape index: {}]
  %s4 = inlined_call_operand.vmem [shape: f32[1,64], index: 4, kind: input, shape index: {}]
  %s5 = inlined_call_operand.vmem [shape: f32[64,32], index: 5, kind: input, shape index: {}]
  %s6 = inlined_call_operand.vmem [shape: f32[1,32], index: 6, kind: input, shape index: {}]
  %s7 = inlined_call_operand.hbm [shape: f32[6,32], index: 7, kind: output, shape index: {}]
  %s8 = sld [smem:[#allocation0]]
  $region38: #{tpu_custom_call.1} parent=0
    _
  %s10 = ssub.s32 1, %s8
  %s11 = scalar_select 0, %s10, %s8
  $region1: #{tpu_custom_call.1} parent=0
    #allocation2 [shape = 'u8[4096]{0}', space=vmem, size = 0x1000, scoped, tag = 'output window, operand 0, single buffered']
    #allocation3 [shape = 's32[1]{0}', space=sflag, size = 0x4, scoped, tag = 'scoped memory for tpu_custom_call.1']
    %12 = vsyncpa [#allocation3], 0
    // Predicated region
    $region2: #{tpu_custom_call.1} parent=1 // pred_check
      _
    $region3: #{tpu_custom_call.1} parent=1 // pred_check_branch
      %14 = sbr.rel (0) target = $region5
    $region4: #{tpu_custom_call.1} parent=1 // pred_region
      _
    $region5: #{tpu_custom_call.1} parent=1 // pred_fallthru
      _
    // Predicated region
    $region6: #{tpu_custom_call.1} parent=1 // pred_check
      _
    $region7: #{tpu_custom_call.1} parent=1 // pred_check_branch
      %16 = sbr.rel (0) target = $region9
    $region8: #{tpu_custom_call.1} parent=1 // pred_region
      _
    $region9: #{tpu_custom_call.1} parent=1 // pred_fallthru
      _
    // Predicated region
    $region10: #{tpu_custom_call.1} parent=1 // pred_check
      _
    $region11: #{tpu_custom_call.1} parent=1 // pred_check_branch
      %18 = sbr.rel (0) target = $region13
    $region12: #{tpu_custom_call.1} parent=1 // pred_region
      _
    $region13: #{tpu_custom_call.1} parent=1 // pred_fallthru
      _
    // Predicated region
    $region14: #{tpu_custom_call.1} parent=1 // pred_check
      _
    $region15: #{tpu_custom_call.1} parent=1 // pred_check_branch
      %20 = sbr.rel (0) target = $region17
    $region16: #{tpu_custom_call.1} parent=1 // pred_region
      _
    $region17: #{tpu_custom_call.1} parent=1 // pred_fallthru
      _
    // Predicated region
    $region18: #{tpu_custom_call.1} parent=1 // pred_check
      _
    $region19: #{tpu_custom_call.1} parent=1 // pred_check_branch
      %22 = sbr.rel (0) target = $region21
    $region20: #{tpu_custom_call.1} parent=1 // pred_region
      _
    $region21: #{tpu_custom_call.1} parent=1 // pred_fallthru
      _
    // Predicated region
    $region22: #{tpu_custom_call.1} parent=1 // pred_check
      _
    $region23: #{tpu_custom_call.1} parent=1 // pred_check_branch
      %24 = sbr.rel (0) target = $region25
    $region24: #{tpu_custom_call.1} parent=1 // pred_region
      _
    $region25: #{tpu_custom_call.1} parent=1 // pred_fallthru
      _
    // Predicated region
    $region26: #{tpu_custom_call.1} parent=1 // pred_check
      _
    $region27: #{tpu_custom_call.1} parent=1 // pred_check_branch
      %26 = sbr.rel (0) target = $region29
    $region28: #{tpu_custom_call.1} parent=1 // pred_region
      _
    $region29: #{tpu_custom_call.1} parent=1 // pred_fallthru
      _
    %v27 = vld [vmem:[%s0] sm:$0x3f]
    %v28 = vld [vmem:[%s1] sm:$0xff]
    %v29 = vld [vmem:[%s1 + $0x8] sm:$0xf]
    %v30 = vld [vmem:[%s2] sm:$0x1]
    %v32 = vperm.slane %v30, 0
    %vm34 = vcmask 97280
    %v36 = vsel %vm34, %v27, 0
    %vm38 = vcmask 1043456
    %v40 = vsel %vm38, %v29, 0
    %42 = vmatpush.msra.mxu0 0.0
    %43 = vmatpush.msra.mxu0 0.0
    %44 = vmatpush.msra.mxu0 0.0
    %45 = vmatpush.msra.mxu0 0.0
    %46 = vmatpush.msra.mxu0 0.0
    %47 = vmatpush.msra.mxu0 0.0
    %48 = vmatpush.msra.mxu0 0.0
    %49 = vmatpush.msra.mxu0 0.0
    %50 = vmatpush.msra.mxu0 0.0
    %51 = vmatpush.msra.mxu0 0.0
    %52 = vmatpush.msra.mxu0 0.0
    %53 = vmatpush.msra.mxu0 0.0
    %54 = vmatpush.msra.mxu0 0.0
    %55 = vmatpush.msra.mxu0 0.0
    %56 = vmatpush.msra.mxu0 %v40
    %57 = vmatpush.msra.mxu0 %v28
    %58 = vmatmul.f32.gmra.mxu0 %v36
    %v59 = vpop.f32.mrf.mxu0
    %v60 = vadd.f32 %v32, %v59
    %61 = vdwg.mxu0
    %v62 = vld [vmem:[%s3] sm:$0xff]
    %v63 = vld [vmem:[%s3 + $0x8] sm:$0xff]
    %v64 = vld [vmem:[%s3 + $0x10] sm:$0xff]
    %v65 = vld [vmem:[%s3 + $0x18] sm:$0xff]
    %v66 = vld [vmem:[%s4] sm:$0x1]
    %v68 = vperm.slane %v66, 0
    %vm70 = vcmask 261120
    %v72 = vsel %vm70, %v60, 0
    %74 = vmatpush.msra.mxu0 0.0
    %75 = vmatpush.msra.mxu0 0.0
    %76 = vmatpush.msra.mxu0 0.0
    %77 = vmatpush.msra.mxu0 0.0
    %78 = vmatpush.msra.mxu0 0.0
    %79 = vmatpush.msra.mxu0 0.0
    %80 = vmatpush.msra.mxu0 0.0
    %81 = vmatpush.msra.mxu0 0.0
    %82 = vmatpush.msra.mxu0 0.0
    %83 = vmatpush.msra.mxu0 0.0
    %84 = vmatpush.msra.mxu0 0.0
    %85 = vmatpush.msra.mxu0 0.0
    %86 = vmatpush.msra.mxu0 %v65
    %87 = vmatpush.msra.mxu0 %v64
    %88 = vmatpush.msra.mxu0 %v63
    %89 = vmatpush.msra.mxu0 %v62
    %90 = vmatmul.f32.gmra.mxu0 %v72
    %v91 = vpop.f32.mrf.mxu0
    %v92 = vadd.f32 %v68, %v91
    %93 = vdwg.mxu0
    %v94 = vmax.f32 %v92, 0.0
    %v95 = vld [vmem:[%s5] sm:$0xff]
    %v96 = vld [vmem:[%s5 + $0x8] sm:$0xff]
    %v97 = vld [vmem:[%s5 + $0x10] sm:$0xff]
    %v98 = vld [vmem:[%s5 + $0x18] sm:$0xff]
    %v99 = vld [vmem:[%s5 + $0x20] sm:$0xff]
    %v100 = vld [vmem:[%s5 + $0x28] sm:$0xff]
    %v101 = vld [vmem:[%s5 + $0x30] sm:$0xff]
    %v102 = vld [vmem:[%s5 + $0x38] sm:$0xff]
    %v103 = vld [vmem:[%s6] sm:$0x1]
    %v105 = vperm.slane %v103, 0
    %vm107 = vcmask 523264
    %v109 = vsel %vm107, %v94, 0
    %111 = vmatpush.msra.mxu0 0.0
    %112 = vmatpush.msra.mxu0 0.0
    %113 = vmatpush.msra.mxu0 0.0
    %114 = vmatpush.msra.mxu0 0.0
    %115 = vmatpush.msra.mxu0 0.0
    %116 = vmatpush.msra.mxu0 0.0
    %117 = vmatpush.msra.mxu0 0.0
    %118 = vmatpush.msra.mxu0 0.0
    %119 = vmatpush.msra.mxu0 %v102
    %120 = vmatpush.msra.mxu0 %v101
    %121 = vmatpush.msra.mxu0 %v100
    %122 = vmatpush.msra.mxu0 %v99
    %123 = vmatpush.msra.mxu0 %v98
    %124 = vmatpush.msra.mxu0 %v97
    %125 = vmatpush.msra.mxu0 %v96
    %126 = vmatpush.msra.mxu0 %v95
    %127 = vmatmul.f32.gmra.mxu0 %v109
    %v128 = vpop.f32.mrf.mxu0
    %v129 = vadd.f32 %v105, %v128
    %130 = vdwg.mxu0
    %vm131 = vcmask 259072
    %132 = vst.msk [vmem:[#allocation2] sm:$0x3f] %vm131, %v129
    // Predicated region
    $region30: #{tpu_custom_call.1} parent=1 // pred_check
      _
    $region31: #{tpu_custom_call.1} parent=1 // pred_check_branch
      %134 = sbr.rel (0) target = $region33
    $region32: #{tpu_custom_call.1} parent=1 // pred_region
      %136 = vsyncadd [#allocation3], 0
      %s138 = sshll.u32 [#allocation2], 4
      %s139 = int_to_ptr.vmem [resolvable:$true] %s138
      %s140 = sshll.u32 %s7, 4
      %s141 = int_to_ptr.hbm [resolvable:$true] %s140
      %143 = dma.vmem_to_hbm [thread:$0]  %s139, 128, %s141, [#allocation3]
    $region33: #{tpu_custom_call.1} parent=1 // pred_fallthru
      _
    // Predicated region
    $region34: #{tpu_custom_call.1} parent=1 // pred_check
      _
    $region35: #{tpu_custom_call.1} parent=1 // pred_check_branch
      %145 = sbr.rel (0) target = $region37
    $region36: #{tpu_custom_call.1} parent=1 // pred_region
      %147 = dma.done [#allocation3], 128
    $region37: #{tpu_custom_call.1} parent=1 // pred_fallthru
      _
    %148 = vsyncpa [#allocation3], 1

</llo_original>
